<compile_context>
chip_gen: v7x
topology: tpu7x:2x2x1
jax: 0.10.0
libtpu: 0.0.40
codegen_flags: <defaults>
</compile_context>

<pallas_src>
import jax
import jax.numpy as jnp
from jax.experimental import pallas as pl
from jax.experimental.pallas import tpu as pltpu


def _make_energy_shifter_kernel(num_types):
    """Kernel factory; num_types is static (shape of self_energies)."""

    def kernel(se_ref, species_ref, energies_ref, out_ref):
        # se_ref       : SMEM (num_types,) f32   -- self energies (scalar reads)
        # species_ref  : VMEM (c_tile, A)  int   -- conformations on sublanes, atoms on lanes
        # energies_ref : VMEM (c_tile, 1)  f32
        # out_ref      : VMEM (c_tile, 1)  f32
        species = species_ref[...].astype(jnp.int32)  # int8/int16/int32 inputs all fine
        # Atom types are mutually exclusive -> chained select (cmp + sel per
        # type).  Padding atoms (species == -1) and any out-of-range value fall
        # through to a 0 contribution.
        per_atom = jnp.zeros(species.shape, jnp.float32)
        for k in reversed(range(num_types)):
            per_atom = jnp.where(species == k, se_ref[k], per_atom)
        # Reduce over atoms (lane axis).  NOTE: the ragged final grid block may
        # hold unspecified data in sublanes past C; that is safe only because
        # the reduce runs along the full-extent (un-padded) atoms axis, so the
        # garbage stays confined to output rows whose stores Pallas drops.
        # Do not change the reduce axis / layout without revisiting this.
        sae = jnp.sum(per_atom, axis=-1, keepdims=True)          # (c_tile, 1)
        out_ref[...] = energies_ref[...] + sae

    return kernel


def _vmem_budget_bytes():
    """Per-chip VMEM budget with headroom (v7x: 64 MiB phys; v5e/v6e: 128 MiB)."""
    phys = 64 << 20  # conservative default (v7x per-TensorCore VMEM)
    try:
        info = pltpu.get_tpu_info()
        phys = int(getattr(info, "vmem_capacity_bytes", phys))
    except Exception:
        pass
    return min(phys // 4, 24 << 20)


def _pick_conf_tile(C, A, species_itemsize, max_conf_tile, budget_bytes):
    """Largest 128-multiple conformation tile that fits the VMEM budget."""
    # Double-buffered species + energies inputs, double-buffered output.
    per_conf = 2 * (A * species_itemsize + 4) + 2 * 4
    tile = min(max_conf_tile, budget_bytes // per_conf)
    if C >= 256:
        tile = min(tile, C // 2)  # >= 2 grid steps -> both v7x TensorCores get work
    tile = (tile // 128) * 128
    if tile < 128 or tile >= C:
        return C  # single full-extent block (no padding needed)
    return tile


def _reference_forward(self_energies, species, energies):
    """Fused XLA gather+reduce matching the PyTorch module (used for tiny C)."""
    se = jnp.asarray(self_energies, jnp.float32)
    idx = jnp.clip(species, 0, se.shape[0] - 1).astype(jnp.int32)
    gathered = jnp.where(species == -1, jnp.float32(0.0), se[idx])
    sae = gathered.sum(axis=1)
    return energies + sae.astype(energies.dtype)


def energy_shifter_forward(self_energies, species, energies, *,
                           max_conf_tile=16384,
                           min_pallas_conformations=256,
                           use_pallas=None):
    """(species, energies) -> (species, energies + sae), like EnergyShifter.forward."""
    C, A = species.shape
    se = jnp.asarray(self_energies, jnp.float32)
    num_types = int(se.shape[0])

    if use_pallas is None:
        use_pallas = C >= min_pallas_conformations
    if not use_pallas:
        # Tiny batches: pallas_call dispatch overhead dwarfs the work.
        return species, _reference_forward(se, species, energies)

    species_arr = species
    if not jnp.issubdtype(species_arr.dtype, jnp.integer):
        species_arr = species_arr.astype(jnp.int32)
    sp_sz = species_arr.dtype.itemsize
    energies_col = energies.astype(jnp.float32).reshape(C, 1)  # cheap (C*4 bytes)

    budget = _vmem_budget_bytes()
    c_tile = _pick_conf_tile(C, A, sp_sz, max_conf_tile, budget)
    grid = (pl.cdiv(C, c_tile),)

    # Explicit scoped-VMEM limit: covers double-buffered tiles with margin,
    # safe on v5e's 16 MiB default and under v7x's 64 MiB physical VMEM.
    needed = 2 * c_tile * (A * sp_sz + 4) + 2 * c_tile * 4 + (1 << 20)
    vmem_limit = int(min(max(2 * needed, 16 << 20), 48 << 20))

    out = pl.pallas_call(
        _make_energy_shifter_kernel(num_types),
        out_shape=jax.ShapeDtypeStruct((C, 1), jnp.float32),
        grid=grid,
        in_specs=[
            pl.BlockSpec(memory_space=pltpu.MemorySpace.SMEM),   # self_energies (num_types,)
            pl.BlockSpec((c_tile, A), lambda i: (i, 0)),         # species tile (c_tile, A)
            pl.BlockSpec((c_tile, 1), lambda i: (i, 0)),         # energies tile (c_tile, 1)
        ],
        out_specs=pl.BlockSpec((c_tile, 1), lambda i: (i, 0)),
        compiler_params=pltpu.CompilerParams(
            dimension_semantics=("parallel",),
            vmem_limit_bytes=vmem_limit,
        ),
    )(se, species_arr, energies_col)

    return species, out[:, 0].astype(energies.dtype)


if __name__ == "__main__":
    key = jax.random.PRNGKey(0)
    k1, k2, k3, k4, k5, k6 = jax.random.split(key, 6)

    # ANI-style setup: 4 atom types (H, C, N, O), self energies in Hartree.
    self_energies = jnp.array([-0.600953, -38.08316, -54.7077, -75.194466],
                              dtype=jnp.float32)

    # Case 1: int8 species (dominant HBM stream cut 4x), multi-step grid with a
    # ragged final block (400 = 3*128 + 16).
    C1, A1 = 400, 11
    species1 = jax.random.randint(k1, (C1, A1), -1, 4, dtype=jnp.int32).astype(jnp.int8)
    energies1 = jax.random.normal(k2, (C1,), dtype=jnp.float32)
    out_sp1, out1 = energy_shifter_forward(self_energies, species1, energies1)
    out1 = jax.block_until_ready(out1)
    exp1 = _reference_forward(self_energies, species1, energies1)
    assert out_sp1.shape == species1.shape
    assert out1.shape == (C1,)
    assert jnp.allclose(out1, exp1, rtol=1e-5, atol=1e-3)

    # Case 2: int32 species, auto tile capped at C/2 -> 2 parallel grid steps.
    C2, A2 = 512, 8
    species2 = jax.random.randint(k3, (C2, A2), -1, 4, dtype=jnp.int32)
    energies2 = jax.random.normal(k4, (C2,), dtype=jnp.float32)
    _, out2 = energy_shifter_forward(self_energies, species2, energies2)
    out2 = jax.block_until_ready(out2)
    exp2 = _reference_forward(self_energies, species2, energies2)
    assert jnp.allclose(out2, exp2, rtol=1e-5, atol=1e-3)

    # Case 3: forced Pallas path with a single full-extent block.
    C3, A3 = 192, 7
    species3 = jax.random.randint(k5, (C3, A3), -1, 4, dtype=jnp.int32)
    energies3 = jax.random.normal(k6, (C3,), dtype=jnp.float32)
    _, out3 = energy_shifter_forward(self_energies, species3, energies3, use_pallas=True)
    out3 = jax.block_until_ready(out3)
    exp3 = _reference_forward(self_energies, species3, energies3)
    assert jnp.allclose(out3, exp3, rtol=1e-5, atol=1e-3)

    # Case 4: tiny batch dispatches to the fused XLA path (no Pallas launch).
    C4, A4 = 6, 11
    species4 = jax.random.randint(k1, (C4, A4), -1, 4, dtype=jnp.int32)
    energies4 = jax.random.normal(k2, (C4,), dtype=jnp.float32)
    out_sp4, out4 = energy_shifter_forward(self_energies, species4, energies4)
    out4 = jax.block_until_ready(out4)
    exp4 = _reference_forward(self_energies, species4, energies4)
    assert out_sp4.shape == species4.shape
    assert jnp.allclose(out4, exp4, rtol=1e-5, atol=1e-3)

    print("KERNEL_OK")
</pallas_src>

<mosaic_0001>
module attributes {stable_mosaic.version = 11 : i64} {
  func.func @kernel(%arg0: i32, %arg1: memref<4xf32, #tpu.memory_space<smem>>, %arg2: memref<128x11xi8, #tpu.memory_space<vmem>>, %arg3: memref<128x1xf32, #tpu.memory_space<vmem>>, %arg4: memref<128x1xf32, #tpu.memory_space<vmem>>) attributes {dimension_semantics = [#tpu.dimension_semantics<parallel>], iteration_bounds = array<i64: 4>, scalar_prefetch = 0 : i64, scratch_operands = 0 : i64, tpu.core_type = #tpu.core_type<tc>, window_params = [{transform_indices = @transform_0, window_bounds = array<i64: 4>}, {transform_indices = @transform_1, window_bounds = array<i64: 128, 11>}, {transform_indices = @transform_2, window_bounds = array<i64: 128, 1>}, {transform_indices = @transform_3, window_bounds = array<i64: 128, 1>}]} {
    %c0 = arith.constant 0 : index
    %c0_0 = arith.constant 0 : index
    %0 = vector.load %arg2[%c0, %c0_0] : memref<128x11xi8, #tpu.memory_space<vmem>>, vector<128x11xi8>
    %1 = arith.extsi %0 : vector<128x11xi8> to vector<128x11xi32>
    %cst = arith.constant 0.000000e+00 : f32
    %2 = vector.broadcast %cst : f32 to vector<128x11xf32>
    %c3_i32 = arith.constant 3 : i32
    %3 = vector.broadcast %c3_i32 : i32 to vector<128x11xi32>
    %4 = arith.cmpi eq, %1, %3 : vector<128x11xi32>
    %c3 = arith.constant 3 : index
    %5 = memref.load %arg1[%c3] : memref<4xf32, #tpu.memory_space<smem>>
    %6 = vector.broadcast %5 : f32 to vector<128x11xf32>
    %7 = arith.select %4, %6, %2 : vector<128x11xi1>, vector<128x11xf32>
    %c2_i32 = arith.constant 2 : i32
    %8 = vector.broadcast %c2_i32 : i32 to vector<128x11xi32>
    %9 = arith.cmpi eq, %1, %8 : vector<128x11xi32>
    %c2 = arith.constant 2 : index
    %10 = memref.load %arg1[%c2] : memref<4xf32, #tpu.memory_space<smem>>
    %11 = vector.broadcast %10 : f32 to vector<128x11xf32>
    %12 = arith.select %9, %11, %7 : vector<128x11xi1>, vector<128x11xf32>
    %c1_i32 = arith.constant 1 : i32
    %13 = vector.broadcast %c1_i32 : i32 to vector<128x11xi32>
    %14 = arith.cmpi eq, %1, %13 : vector<128x11xi32>
    %c1 = arith.constant 1 : index
    %15 = memref.load %arg1[%c1] : memref<4xf32, #tpu.memory_space<smem>>
    %16 = vector.broadcast %15 : f32 to vector<128x11xf32>
    %17 = arith.select %14, %16, %12 : vector<128x11xi1>, vector<128x11xf32>
    %c0_i32 = arith.constant 0 : i32
    %18 = vector.broadcast %c0_i32 : i32 to vector<128x11xi32>
    %19 = arith.cmpi eq, %1, %18 : vector<128x11xi32>
    %c0_1 = arith.constant 0 : index
    %20 = memref.load %arg1[%c0_1] : memref<4xf32, #tpu.memory_space<smem>>
    %21 = vector.broadcast %20 : f32 to vector<128x11xf32>
    %22 = arith.select %19, %21, %17 : vector<128x11xi1>, vector<128x11xf32>
    %cst_2 = arith.constant dense<0.000000e+00> : vector<128xf32>
    %23 = vector.multi_reduction <add>, %22, %cst_2 [1] : vector<128x11xf32> to vector<128xf32>
    %24 = vector.shape_cast %23 : vector<128xf32> to vector<128x1xf32>
    %c0_3 = arith.constant 0 : index
    %c0_4 = arith.constant 0 : index
    %25 = vector.load %arg3[%c0_3, %c0_4] : memref<128x1xf32, #tpu.memory_space<vmem>>, vector<128x1xf32>
    %26 = arith.addf %25, %24 : vector<128x1xf32>
    %c0_5 = arith.constant 0 : index
    %c0_6 = arith.constant 0 : index
    %27 = vector.load %arg4[%c0_5, %c0_6] : memref<128x1xf32, #tpu.memory_space<vmem>>, vector<128x1xf32>
    tpu.vector_store %arg4[%c0_5, %c0_6], %26 {strides = array<i32>} : memref<128x1xf32, #tpu.memory_space<vmem>>, vector<128x1xf32>,
    return
  }
  func.func @transform_0(%arg0: i32) -> i32 {
    %c0_i32 = arith.constant 0 : i32
    %c0_i32_0 = arith.constant 0 : i32
    return %c0_i32 : i32
  }
  func.func @transform_1(%arg0: i32) -> (i32, i32) {
    %c0_i32 = arith.constant 0 : i32
    %c0_i32_0 = arith.constant 0 : i32
    return %arg0, %c0_i32 : i32, i32
  }
  func.func @transform_2(%arg0: i32) -> (i32, i32) {
    %c0_i32 = arith.constant 0 : i32
    %c0_i32_0 = arith.constant 0 : i32
    return %arg0, %c0_i32 : i32, i32
  }
  func.func @transform_3(%arg0: i32) -> (i32, i32) {
    %c0_i32 = arith.constant 0 : i32
    %c0_i32_0 = arith.constant 0 : i32
    return %arg0, %c0_i32 : i32, i32
  }
}

</mosaic_0001>

<llo_original>
// kernel: tpu_custom_call.1
$region0: #{tpu_custom_call.1}
  #allocation0 [shape = 'u32[]', space=smem, size = 0x4, offset = 0x4, fixed_abs, tag = 'smem constant byte address 0x4 - core index']
  #allocation1 [shape = 'u32[144,128]{1,0:T(1,128)}', space=vmem, size = 0x12000, scoped, tag = 'internal scratch']
  %s0 = inlined_call_operand.vmem [shape: f32[4], index: 0, kind: input, shape index: {}]
  %s1 = inlined_call_operand.vmem [shape: s8[400,11], index: 1, kind: input, shape index: {}]
  %s2 = inlined_call_operand.vmem [shape: f32[400,1], index: 2, kind: input, shape index: {}]
  %s3 = inlined_call_operand.vmem [shape: f32[400,1], index: 3, kind: output, shape index: {}]
  %s4 = sld [smem:[#allocation0]]
  $region97: #{tpu_custom_call.1} parent=0
    _
  %s6 = ssub.s32 1, %s4
  %s7 = scalar_select 0, %s6, %s4
  $region1: #{tpu_custom_call.1} parent=0
    #allocation2 [shape = 'u8[512]{0}', space=smem, size = 0x200, scoped, tag = 'input window, operand 0, single buffered']
    #allocation3 [shape = 's32[2]{0}', space=sflag, size = 0x8, scoped, tag = 'scoped memory for tpu_custom_call.1']
    #allocation4 [shape = 'u8[131072]{0}', space=vmem, size = 0x20000, scoped, tag = 'output window, operand 0']
    %8 = vsyncpa [#allocation3], 0
    loop: start=0, step=1, limit=6
    $region2: #{tpu_custom_call.1} parent=1 // loop_pre_header
      _
    $region3: #{tpu_custom_call.1} parent=1 // loop_header
      %s10 = sphi 0, %s14
      %p11 = scmp.ge.s32.totalorder %s10, 6
      %s18 = sphi 0, %s18
      %s20 = sphi 0, %s18
      %s21 = sphi 0, %s20
      %s35 = sphi 0, %s21
      %s41 = sphi 0, %s43
      %s44 = sphi 0, %s41
      %s45 = sphi 0, %s44
      %s61 = sphi 0, %s45
      %s67 = sphi 0, %s69
      %s70 = sphi 0, %s67
      %s71 = sphi 0, %s70
      %s87 = sphi 0, %s71
      %s93 = sphi 0, %s95
      %s96 = sphi 0, %s93
      %s97 = sphi 0, %s96
      %s113 = sphi 0, %s97
    $region4: #{tpu_custom_call.1} parent=1 // loop_header_branch
      %13 = sbr.rel (%p11) target = $region8
    $region5: #{tpu_custom_call.1} parent=1 // loop_body
      %s15 = ssub.s32 %s10, 1
      %s16 = ssub.s32 %s10, 2
      %s17 = sadd.s32 %s10, 1
      %s19 = sadd.s32 %s18, 1
      %p22 = scmp.eq.s32.totalorder %s10, 3
      %p23 = scmp.ne.s32.totalorder %s18, %s20
      %p24 = scmp.eq.s32.totalorder %s10, 0
      %p25 = por %p23, %p24
      %p26 = scmp.ne.s32.totalorder %s18, %s20
      %p27 = scmp.eq.s32.totalorder %s15, 3
      %p28 = por %p26, %p27
      %p29 = scmp.ne.s32.totalorder %s20, %s21
      %p30 = scmp.eq.s32.totalorder %s15, 0
      %p31 = por %p29, %p30
      %p32 = scmp.ne.s32.totalorder %s20, %s21
      %p33 = scmp.eq.s32.totalorder %s16, 3
      %p34 = por %p32, %p33
      %p36 = scmp.ne.s32.totalorder %s21, %s35
      %p37 = scmp.eq.s32.totalorder %s16, 0
      %p38 = por %p36, %p37
      %s39 = ssub.s32 %s10, %s17
      %p40 = scmp.eq.s32.totalorder %s39, 0
      %s42 = sadd.s32 %s41, 1
      %s43 = scalar_select %p40, %s41, %s42
      %p46 = pneg %p40
      %p47 = scmp.eq.s32.totalorder %s10, 3
      %p48 = por %p46, %p47
      %p49 = scmp.ne.s32.totalorder %s41, %s44
      %p50 = scmp.eq.s32.totalorder %s10, 0
      %p51 = por %p49, %p50
      %p52 = scmp.ne.s32.totalorder %s41, %s44
      %p53 = scmp.eq.s32.totalorder %s15, 3
      %p54 = por %p52, %p53
      %p55 = scmp.ne.s32.totalorder %s44, %s45
      %p56 = scmp.eq.s32.totalorder %s15, 0
      %p57 = por %p55, %p56
      %p58 = scmp.ne.s32.totalorder %s44, %s45
      %p59 = scmp.eq.s32.totalorder %s16, 3
      %p60 = por %p58, %p59
      %p62 = scmp.ne.s32.totalorder %s45, %s61
      %p63 = scmp.eq.s32.totalorder %s16, 0
      %p64 = por %p62, %p63
      %s65 = ssub.s32 %s10, %s17
      %p66 = scmp.eq.s32.totalorder %s65, 0
      %s68 = sadd.s32 %s67, 1
      %s69 = scalar_select %p66, %s67, %s68
      %p72 = pneg %p66
      %p73 = scmp.eq.s32.totalorder %s10, 3
      %p74 = por %p72, %p73
      %p75 = scmp.ne.s32.totalorder %s67, %s70
      %p76 = scmp.eq.s32.totalorder %s10, 0
      %p77 = por %p75, %p76
      %p78 = scmp.ne.s32.totalorder %s67, %s70
      %p79 = scmp.eq.s32.totalorder %s15, 3
      %p80 = por %p78, %p79
      %p81 = scmp.ne.s32.totalorder %s70, %s71
      %p82 = scmp.eq.s32.totalorder %s15, 0
      %p83 = por %p81, %p82
      %p84 = scmp.ne.s32.totalorder %s70, %s71
      %p85 = scmp.eq.s32.totalorder %s16, 3
      %p86 = por %p84, %p85
      %p88 = scmp.ne.s32.totalorder %s71, %s87
      %p89 = scmp.eq.s32.totalorder %s16, 0
      %p90 = por %p88, %p89
      %s91 = ssub.s32 %s10, %s17
      %p92 = scmp.eq.s32.totalorder %s91, 0
      %s94 = sadd.s32 %s93, 1
      %s95 = scalar_select %p92, %s93, %s94
      %p98 = pneg %p92
      %p99 = scmp.eq.s32.totalorder %s10, 3
      %p100 = por %p98, %p99
      %p101 = scmp.ne.s32.totalorder %s93, %s96
      %p102 = scmp.eq.s32.totalorder %s10, 0
      %p103 = por %p101, %p102
      %p104 = scmp.ne.s32.totalorder %s93, %s96
      %p105 = scmp.eq.s32.totalorder %s15, 3
      %p106 = por %p104, %p105
      %p107 = scmp.ne.s32.totalorder %s96, %s97
      %p108 = scmp.eq.s32.totalorder %s15, 0
      %p109 = por %p107, %p108
      %p110 = scmp.ne.s32.totalorder %s96, %s97
      %p111 = scmp.eq.s32.totalorder %s16, 3
      %p112 = por %p110, %p111
      %p114 = scmp.ne.s32.totalorder %s97, %s113
      %p115 = scmp.eq.s32.totalorder %s16, 0
      %p116 = por %p114, %p115
      %p117 = scmp.le.s32.totalorder 1, %s10
      %p118 = scmp.lt.s32.totalorder %s10, 5
      %p119 = pnand %p117, %p118
      %p120 = pneg %p119
      // Predicated region
      $region9: #{tpu_custom_call.1} parent=5 // pred_check
        _
      $region10: #{tpu_custom_call.1} parent=5 // pred_check_branch
        %122 = sbr.rel (%p119) target = $region12
      $region11: #{tpu_custom_call.1} parent=5 // pred_region
        %s123 = ssub.s32 %s10, 1
        // Predicated region
        $region13: #{tpu_custom_call.1} parent=11 // pred_check
          %p124 = pneg %p31
        $region14: #{tpu_custom_call.1} parent=11 // pred_check_branch
          %126 = sbr.rel (%p124) target = $region16
        $region15: #{tpu_custom_call.1} parent=11 // pred_region
          %s128 = ssub.s32 16, 16
          %129 = vsyncadd [#allocation3], %s128
          %s131 = sshll.u32 %s0, 4
          %s132 = int_to_ptr.vmem [resolvable:$true] %s131
          %134 = dma.vmem_to_smem %s132, 16, [#allocation2], [#allocation3]
        $region16: #{tpu_custom_call.1} parent=11 // pred_fallthru
          _
      $region12: #{tpu_custom_call.1} parent=5 // pred_fallthru
        _
      %p135 = scmp.lt.s32.totalorder %s10, 4
      // Predicated region
      $region17: #{tpu_custom_call.1} parent=5 // pred_check
        %p136 = pneg %p135
      $region18: #{tpu_custom_call.1} parent=5 // pred_check_branch
        %138 = sbr.rel (%p136) target = $region20
      $region19: #{tpu_custom_call.1} parent=5 // pred_region
        // Predicated region
        $region21: #{tpu_custom_call.1} parent=19 // pred_check
          %p139 = pneg %p51
        $region22: #{tpu_custom_call.1} parent=19 // pred_check_branch
          %141 = sbr.rel (%p139) target = $region24
        $region23: #{tpu_custom_call.1} parent=19 // pred_region
          %s142 = smul.u32 16, %s10
          %s143 = ssub.s32 50, %s142
          %p144 = scmp.lt.s32.totalorder %s143, 16
          %s145 = scalar_select %p144, %s143, 16
          %s146 = smul.u32 32, %s145
          %p147 = scmp.lt.s32.totalorder %s142, 49
          %s148 = scalar_select %p147, %s142, 49
          %s149 = smul.addr %s148, 2
          %s150 = scalar_lea.vmem %s1, %s149
          %s151 = smul.u32 16, %s10
          %s152 = ssub.s32 50, %s151
          %p153 = scmp.lt.s32.totalorder %s152, 16
          %s154 = scalar_select %p153, %s152, 16
          %s155 = smul.u32 32, %s154
        $region24: #{tpu_custom_call.1} parent=19 // pred_fallthru
          _
        // Predicated region
        $region25: #{tpu_custom_call.1} parent=19 // pred_check
          %p156 = pneg %p77
        $region26: #{tpu_custom_call.1} parent=19 // pred_check_branch
          %158 = sbr.rel (%p156) target = $region28
        $region27: #{tpu_custom_call.1} parent=19 // pred_region
          %s159 = smul.u32 16, %s10
          %s160 = ssub.s32 50, %s159
          %p161 = scmp.lt.s32.totalorder %s160, 16
          %s162 = scalar_select %p161, %s160, 16
          %s163 = smul.u32 128, %s162
          %p164 = scmp.lt.s32.totalorder %s159, 49
          %s165 = scalar_select %p164, %s159, 49
          %s166 = smul.addr %s165, 8
          %s167 = scalar_lea.vmem %s2, %s166
          %s168 = smul.u32 16, %s10
          %s169 = ssub.s32 50, %s168
          %p170 = scmp.lt.s32.totalorder %s169, 16
          %s171 = scalar_select %p170, %s169, 16
          %s172 = smul.u32 128, %s171
        $region28: #{tpu_custom_call.1} parent=19 // pred_fallthru
          _
      $region20: #{tpu_custom_call.1} parent=5 // pred_fallthru
        _
      %p173 = scmp.le.s32.totalorder 1, %s10
      %p174 = scmp.lt.s32.totalorder %s10, 5
      %p175 = pnand %p173, %p174
      %p176 = pneg %p175
      // Predicated region
      $region29: #{tpu_custom_call.1} parent=5 // pred_check
        _
      $region30: #{tpu_custom_call.1} parent=5 // pred_check_branch
        %178 = sbr.rel (%p175) target = $region32
      $region31: #{tpu_custom_call.1} parent=5 // pred_region
        %s179 = ssub.s32 %s10, 1
        // Predicated region
        $region33: #{tpu_custom_call.1} parent=31 // pred_check
          %p180 = pneg %p31
        $region34: #{tpu_custom_call.1} parent=31 // pred_check_branch
          %182 = sbr.rel (%p180) target = $region36
        $region35: #{tpu_custom_call.1} parent=31 // pred_region
          %183 = dma.done [#allocation3], 16
        $region36: #{tpu_custom_call.1} parent=31 // pred_fallthru
          _
        %184 = sfence
        %p185 = pneg %p31
        %p186 = pneg %p28
        %s187 = smul.u32 16, %s15
        %s188 = ssub.s32 50, %s187
        %p189 = scmp.lt.s32.totalorder %s188, 16
        %s190 = scalar_select %p189, %s188, 16
        %s191 = smul.u32 32, %s190
        %p192 = scmp.lt.s32.totalorder %s187, 49
        %s193 = scalar_select %p192, %s187, 49
        %s194 = smul.addr %s193, 2
        %s195 = scalar_lea.vmem %s1, %s194
        %p196 = pneg %p57
        %p197 = pneg %p54
        %s198 = smul.u32 16, %s15
        %s199 = ssub.s32 50, %s198
        %p200 = scmp.lt.s32.totalorder %s199, 16
        %s201 = scalar_select %p200, %s199, 16
        %s202 = smul.u32 128, %s201
        %p203 = scmp.lt.s32.totalorder %s198, 49
        %s204 = scalar_select %p203, %s198, 49
        %s205 = smul.addr %s204, 8
        %s206 = scalar_lea.vmem %s2, %s205
        %p207 = pneg %p83
        %p208 = pneg %p80
        %p209 = pneg %p109
        %p210 = pneg %p106
        %s211 = sand.u32 %s96, 1
        %s212 = sand.u32 %s96, 1
        %s213 = smul.addr %s212, 128
        %s214 = scalar_lea.vmem [#allocation4], %s213
        %s215 = smul.u32 16, %s15
        %s216 = ssub.s32 50, %s215
        %p217 = scmp.lt.s32.totalorder %s216, 16
        %s218 = scalar_select %p217, %s216, 16
        %s219 = smul.u32 32, %s218
        %p220 = scmp.lt.s32.totalorder %s215, 49
        %s221 = scalar_select %p220, %s215, 49
        %s222 = smul.addr %s221, 2
        %s223 = scalar_lea.vmem %s1, %s222
        %s224 = smul.u32 16, %s15
        %s225 = ssub.s32 50, %s224
        %p226 = scmp.lt.s32.totalorder %s225, 16
        %s227 = scalar_select %p226, %s225, 16
        %s228 = smul.u32 32, %s227
        %s229 = smul.u32 16, %s15
        %s230 = ssub.s32 50, %s229
        %p231 = scmp.lt.s32.totalorder %s230, 16
        %s232 = scalar_select %p231, %s230, 16
        %s233 = smul.u32 128, %s232
        %p234 = scmp.lt.s32.totalorder %s229, 49
        %s235 = scalar_select %p234, %s229, 49
        %s236 = smul.addr %s235, 8
        %s237 = scalar_lea.vmem %s2, %s236
        %s238 = smul.u32 16, %s15
        %s239 = ssub.s32 50, %s238
        %p240 = scmp.lt.s32.totalorder %s239, 16
        %s241 = scalar_select %p240, %s239, 16
        %s242 = smul.u32 128, %s241
        %s243 = smul.u32 16, %s15
        %s244 = ssub.s32 50, %s243
        %p245 = scmp.lt.s32.totalorder %s244, 16
        %s246 = scalar_select %p245, %s244, 16
        %s247 = smul.u32 128, %s246
        %v248 = vld [vmem:[%s223] sm:$0x3]
        %v249 = vld [vmem:[%s223 + $0x2] sm:$0x3]
        %v250 = vld [vmem:[%s223 + $0x4] sm:$0x3]
        %v251 = vld [vmem:[%s223 + $0x6] sm:$0x3]
        %v252 = vld [vmem:[%s223 + $0x8] sm:$0x3]
        %v253 = vld [vmem:[%s223 + $0xa] sm:$0x3]
        %v254 = vld [vmem:[%s223 + $0xc] sm:$0x3]
        %v255 = vld [vmem:[%s223 + $0xe] sm:$0x3]
        %v256 = vld [vmem:[%s223 + $0x10] sm:$0x3]
        %v257 = vld [vmem:[%s223 + $0x12] sm:$0x3]
        %v258 = vld [vmem:[%s223 + $0x14] sm:$0x3]
        %v259 = vld [vmem:[%s223 + $0x16] sm:$0x3]
        %v260 = vld [vmem:[%s223 + $0x18] sm:$0x3]
        %v261 = vld [vmem:[%s223 + $0x1a] sm:$0x3]
        %v262 = vld [vmem:[%s223 + $0x1c] sm:$0x3]
        %v263 = vld [vmem:[%s223 + $0x1e] sm:$0x3]
        %v264 = vunpack.c.0.s8 %v248
        %v265 = vunpack.c.0.s8 %v249
        %v266 = vunpack.c.0.s8 %v250
        %v267 = vunpack.c.0.s8 %v251
        %v268 = vunpack.c.0.s8 %v252
        %v269 = vunpack.c.0.s8 %v253
        %v270 = vunpack.c.0.s8 %v254
        %v271 = vunpack.c.0.s8 %v255
        %v272 = vunpack.c.0.s8 %v256
        %v273 = vunpack.c.0.s8 %v257
        %v274 = vunpack.c.0.s8 %v258
        %v275 = vunpack.c.0.s8 %v259
        %v276 = vunpack.c.0.s8 %v260
        %v277 = vunpack.c.0.s8 %v261
        %v278 = vunpack.c.0.s8 %v262
        %v279 = vunpack.c.0.s8 %v263
        %vm280 = vcmp.eq.s32.totalorder %v264, 3
        %vm281 = vcmp.eq.s32.totalorder %v265, 3
        %vm282 = vcmp.eq.s32.totalorder %v266, 3
        %vm283 = vcmp.eq.s32.totalorder %v267, 3
        %vm284 = vcmp.eq.s32.totalorder %v268, 3
        %vm285 = vcmp.eq.s32.totalorder %v269, 3
        %vm286 = vcmp.eq.s32.totalorder %v270, 3
        %vm287 = vcmp.eq.s32.totalorder %v271, 3
        %vm288 = vcmp.eq.s32.totalorder %v272, 3
        %vm289 = vcmp.eq.s32.totalorder %v273, 3
        %vm290 = vcmp.eq.s32.totalorder %v274, 3
        %vm291 = vcmp.eq.s32.totalorder %v275, 3
        %vm292 = vcmp.eq.s32.totalorder %v276, 3
        %vm293 = vcmp.eq.s32.totalorder %v277, 3
        %vm294 = vcmp.eq.s32.totalorder %v278, 3
        %vm295 = vcmp.eq.s32.totalorder %v279, 3
        %s296 = sld [smem:[#allocation2 + $0x3]]
        %v297 = vstv %s296
        %v298 = vsel %vm280, %v297, 0.0
        %v299 = vsel %vm281, %v297, 0.0
        %v300 = vsel %vm282, %v297, 0.0
        %v301 = vsel %vm283, %v297, 0.0
        %v302 = vsel %vm284, %v297, 0.0
        %v303 = vsel %vm285, %v297, 0.0
        %v304 = vsel %vm286, %v297, 0.0
        %v305 = vsel %vm287, %v297, 0.0
        %v306 = vsel %vm288, %v297, 0.0
        %v307 = vsel %vm289, %v297, 0.0
        %v308 = vsel %vm290, %v297, 0.0
        %v309 = vsel %vm291, %v297, 0.0
        %v310 = vsel %vm292, %v297, 0.0
        %v311 = vsel %vm293, %v297, 0.0
        %v312 = vsel %vm294, %v297, 0.0
        %v313 = vsel %vm295, %v297, 0.0
        %vm314 = vcmp.eq.s32.totalorder %v264, 2
        %vm315 = vcmp.eq.s32.totalorder %v265, 2
        %vm316 = vcmp.eq.s32.totalorder %v266, 2
        %vm317 = vcmp.eq.s32.totalorder %v267, 2
        %vm318 = vcmp.eq.s32.totalorder %v268, 2
        %vm319 = vcmp.eq.s32.totalorder %v269, 2
        %vm320 = vcmp.eq.s32.totalorder %v270, 2
        %vm321 = vcmp.eq.s32.totalorder %v271, 2
        %vm322 = vcmp.eq.s32.totalorder %v272, 2
        %vm323 = vcmp.eq.s32.totalorder %v273, 2
        %vm324 = vcmp.eq.s32.totalorder %v274, 2
        %vm325 = vcmp.eq.s32.totalorder %v275, 2
        %vm326 = vcmp.eq.s32.totalorder %v276, 2
        %vm327 = vcmp.eq.s32.totalorder %v277, 2
        %vm328 = vcmp.eq.s32.totalorder %v278, 2
        %vm329 = vcmp.eq.s32.totalorder %v279, 2
        %s330 = sld [smem:[#allocation2 + $0x2]]
        %v331 = vstv %s330
        %v332 = vsel %vm314, %v331, %v298
        %v333 = vsel %vm315, %v331, %v299
        %v334 = vsel %vm316, %v331, %v300
        %v335 = vsel %vm317, %v331, %v301
        %v336 = vsel %vm318, %v331, %v302
        %v337 = vsel %vm319, %v331, %v303
        %v338 = vsel %vm320, %v331, %v304
        %v339 = vsel %vm321, %v331, %v305
        %v340 = vsel %vm322, %v331, %v306
        %v341 = vsel %vm323, %v331, %v307
        %v342 = vsel %vm324, %v331, %v308
        %v343 = vsel %vm325, %v331, %v309
        %v344 = vsel %vm326, %v331, %v310
        %v345 = vsel %vm327, %v331, %v311
        %v346 = vsel %vm328, %v331, %v312
        %v347 = vsel %vm329, %v331, %v313
        %vm348 = vcmp.eq.s32.totalorder %v264, 1
        %vm349 = vcmp.eq.s32.totalorder %v265, 1
        %vm350 = vcmp.eq.s32.totalorder %v266, 1
        %vm351 = vcmp.eq.s32.totalorder %v267, 1
        %vm352 = vcmp.eq.s32.totalorder %v268, 1
        %vm353 = vcmp.eq.s32.totalorder %v269, 1
        %vm354 = vcmp.eq.s32.totalorder %v270, 1
        %vm355 = vcmp.eq.s32.totalorder %v271, 1
        %vm356 = vcmp.eq.s32.totalorder %v272, 1
        %vm357 = vcmp.eq.s32.totalorder %v273, 1
        %vm358 = vcmp.eq.s32.totalorder %v274, 1
        %vm359 = vcmp.eq.s32.totalorder %v275, 1
        %vm360 = vcmp.eq.s32.totalorder %v276, 1
        %vm361 = vcmp.eq.s32.totalorder %v277, 1
        %vm362 = vcmp.eq.s32.totalorder %v278, 1
        %vm363 = vcmp.eq.s32.totalorder %v279, 1
        %s364 = sld [smem:[#allocation2 + $0x1]]
        %v365 = vstv %s364
        %v366 = vsel %vm348, %v365, %v332
        %v367 = vsel %vm349, %v365, %v333
        %v368 = vsel %vm350, %v365, %v334
        %v369 = vsel %vm351, %v365, %v335
        %v370 = vsel %vm352, %v365, %v336
        %v371 = vsel %vm353, %v365, %v337
        %v372 = vsel %vm354, %v365, %v338
        %v373 = vsel %vm355, %v365, %v339
        %v374 = vsel %vm356, %v365, %v340
        %v375 = vsel %vm357, %v365, %v341
        %v376 = vsel %vm358, %v365, %v342
        %v377 = vsel %vm359, %v365, %v343
        %v378 = vsel %vm360, %v365, %v344
        %v379 = vsel %vm361, %v365, %v345
        %v380 = vsel %vm362, %v365, %v346
        %v381 = vsel %vm363, %v365, %v347
        %vm382 = vcmp.eq.s32.totalorder %v264, 0
        %vm383 = vcmp.eq.s32.totalorder %v265, 0
        %vm384 = vcmp.eq.s32.totalorder %v266, 0
        %vm385 = vcmp.eq.s32.totalorder %v267, 0
        %vm386 = vcmp.eq.s32.totalorder %v268, 0
        %vm387 = vcmp.eq.s32.totalorder %v269, 0
        %vm388 = vcmp.eq.s32.totalorder %v270, 0
        %vm389 = vcmp.eq.s32.totalorder %v271, 0
        %vm390 = vcmp.eq.s32.totalorder %v272, 0
        %vm391 = vcmp.eq.s32.totalorder %v273, 0
        %vm392 = vcmp.eq.s32.totalorder %v274, 0
        %vm393 = vcmp.eq.s32.totalorder %v275, 0
        %vm394 = vcmp.eq.s32.totalorder %v276, 0
        %vm395 = vcmp.eq.s32.totalorder %v277, 0
        %vm396 = vcmp.eq.s32.totalorder %v278, 0
        %vm397 = vcmp.eq.s32.totalorder %v279, 0
        %s398 = sld [smem:[#allocation2]]
        %v399 = vstv %s398
        %v400 = vsel %vm382, %v399, %v366
        %v401 = vsel %vm383, %v399, %v367
        %v402 = vsel %vm384, %v399, %v368
        %v403 = vsel %vm385, %v399, %v369
        %v404 = vsel %vm386, %v399, %v370
        %v405 = vsel %vm387, %v399, %v371
        %v406 = vsel %vm388, %v399, %v372
        %v407 = vsel %vm389, %v399, %v373
        %v408 = vsel %vm390, %v399, %v374
        %v409 = vsel %vm391, %v399, %v375
        %v410 = vsel %vm392, %v399, %v376
        %v411 = vsel %vm393, %v399, %v377
        %v412 = vsel %vm394, %v399, %v378
        %v413 = vsel %vm395, %v399, %v379
        %v414 = vsel %vm396, %v399, %v380
        %v415 = vsel %vm397, %v399, %v381
        %vm416 = vcmask 89088
        %v417 = vsel %vm416, %v400, 0.0
        %418 = vadd.xlane.f32.xlu0 %v417
        %v419 = vpop.xlane.xlu0 %418
        %v420 = vsel %vm416, %v401, 0.0
        %421 = vadd.xlane.f32.xlu0 %v420
        %v422 = vpop.xlane.xlu0 %421
        %v423 = vsel %vm416, %v402, 0.0
        %424 = vadd.xlane.f32.xlu0 %v423
        %v425 = vpop.xlane.xlu0 %424
        %v426 = vsel %vm416, %v403, 0.0
        %427 = vadd.xlane.f32.xlu0 %v426
        %v428 = vpop.xlane.xlu0 %427
        %v429 = vsel %vm416, %v404, 0.0
        %430 = vadd.xlane.f32.xlu0 %v429
        %v431 = vpop.xlane.xlu0 %430
        %v432 = vsel %vm416, %v405, 0.0
        %433 = vadd.xlane.f32.xlu0 %v432
        %v434 = vpop.xlane.xlu0 %433
        %v435 = vsel %vm416, %v406, 0.0
        %436 = vadd.xlane.f32.xlu0 %v435
        %v437 = vpop.xlane.xlu0 %436
        %v438 = vsel %vm416, %v407, 0.0
        %439 = vadd.xlane.f32.xlu0 %v438
        %v440 = vpop.xlane.xlu0 %439
        %v441 = vsel %vm416, %v408, 0.0
        %442 = vadd.xlane.f32.xlu0 %v441
        %v443 = vpop.xlane.xlu0 %442
        %v444 = vsel %vm416, %v409, 0.0
        %445 = vadd.xlane.f32.xlu0 %v444
        %v446 = vpop.xlane.xlu0 %445
        %v447 = vsel %vm416, %v410, 0.0
        %448 = vadd.xlane.f32.xlu0 %v447
        %v449 = vpop.xlane.xlu0 %448
        %v450 = vsel %vm416, %v411, 0.0
        %451 = vadd.xlane.f32.xlu0 %v450
        %v452 = vpop.xlane.xlu0 %451
        %v453 = vsel %vm416, %v412, 0.0
        %454 = vadd.xlane.f32.xlu0 %v453
        %v455 = vpop.xlane.xlu0 %454
        %v456 = vsel %vm416, %v413, 0.0
        %457 = vadd.xlane.f32.xlu0 %v456
        %v458 = vpop.xlane.xlu0 %457
        %v459 = vsel %vm416, %v414, 0.0
        %460 = vadd.xlane.f32.xlu0 %v459
        %v461 = vpop.xlane.xlu0 %460
        %v462 = vsel %vm416, %v415, 0.0
        %463 = vadd.xlane.f32.xlu0 %v462
        %v464 = vpop.xlane.xlu0 %463
        %v465 = vld [vmem:[%s237] sm:$0xff]
        %v466 = vld [vmem:[%s237 + $0x8] sm:$0xff]
        %v467 = vld [vmem:[%s237 + $0x10] sm:$0xff]
        %v468 = vld [vmem:[%s237 + $0x18] sm:$0xff]
        %v469 = vld [vmem:[%s237 + $0x20] sm:$0xff]
        %v470 = vld [vmem:[%s237 + $0x28] sm:$0xff]
        %v471 = vld [vmem:[%s237 + $0x30] sm:$0xff]
        %v472 = vld [vmem:[%s237 + $0x38] sm:$0xff]
        %v473 = vld [vmem:[%s237 + $0x40] sm:$0xff]
        %v474 = vld [vmem:[%s237 + $0x48] sm:$0xff]
        %v475 = vld [vmem:[%s237 + $0x50] sm:$0xff]
        %v476 = vld [vmem:[%s237 + $0x58] sm:$0xff]
        %v477 = vld [vmem:[%s237 + $0x60] sm:$0xff]
        %v478 = vld [vmem:[%s237 + $0x68] sm:$0xff]
        %v479 = vld [vmem:[%s237 + $0x70] sm:$0xff]
        %v480 = vld [vmem:[%s237 + $0x78] sm:$0xff]
        %v481 = vadd.f32 %v465, %v419
        %v482 = vadd.f32 %v466, %v422
        %v483 = vadd.f32 %v467, %v425
        %v484 = vadd.f32 %v468, %v428
        %v485 = vadd.f32 %v469, %v431
        %v486 = vadd.f32 %v470, %v434
        %v487 = vadd.f32 %v471, %v437
        %v488 = vadd.f32 %v472, %v440
        %v489 = vadd.f32 %v473, %v443
        %v490 = vadd.f32 %v474, %v446
        %v491 = vadd.f32 %v475, %v449
        %v492 = vadd.f32 %v476, %v452
        %v493 = vadd.f32 %v477, %v455
        %v494 = vadd.f32 %v478, %v458
        %v495 = vadd.f32 %v479, %v461
        %v496 = vadd.f32 %v480, %v464
        %vm497 = vcmask 7168
        %498 = vst.msk [vmem:[%s214] sm:$0xff] %vm497, %v481
        %499 = vst.msk [vmem:[%s214 + $0x8] sm:$0xff] %vm497, %v482
        %500 = vst.msk [vmem:[%s214 + $0x10] sm:$0xff] %vm497, %v483
        %501 = vst.msk [vmem:[%s214 + $0x18] sm:$0xff] %vm497, %v484
        %502 = vst.msk [vmem:[%s214 + $0x20] sm:$0xff] %vm497, %v485
        %503 = vst.msk [vmem:[%s214 + $0x28] sm:$0xff] %vm497, %v486
        %504 = vst.msk [vmem:[%s214 + $0x30] sm:$0xff] %vm497, %v487
        %505 = vst.msk [vmem:[%s214 + $0x38] sm:$0xff] %vm497, %v488
        %506 = vst.msk [vmem:[%s214 + $0x40] sm:$0xff] %vm497, %v489
        %507 = vst.msk [vmem:[%s214 + $0x48] sm:$0xff] %vm497, %v490
        %508 = vst.msk [vmem:[%s214 + $0x50] sm:$0xff] %vm497, %v491
        %509 = vst.msk [vmem:[%s214 + $0x58] sm:$0xff] %vm497, %v492
        %510 = vst.msk [vmem:[%s214 + $0x60] sm:$0xff] %vm497, %v493
        %511 = vst.msk [vmem:[%s214 + $0x68] sm:$0xff] %vm497, %v494
        %512 = vst.msk [vmem:[%s214 + $0x70] sm:$0xff] %vm497, %v495
        %513 = vst.msk [vmem:[%s214 + $0x78] sm:$0xff] %vm497, %v496
        %s514 = sand.u32 %s96, 1
        %s515 = sand.u32 %s96, 1
        %s516 = smul.addr %s515, 128
        %s517 = scalar_lea.vmem [#allocation4], %s516
        // Predicated region
        $region37: #{tpu_custom_call.1} parent=31 // pred_check
          %p518 = pneg %p106
        $region38: #{tpu_custom_call.1} parent=31 // pred_check_branch
          %520 = sbr.rel (%p518) target = $region40
        $region39: #{tpu_custom_call.1} parent=31 // pred_region
          %s521 = smul.u32 16, %s15
          %s522 = ssub.s32 50, %s521
          %p523 = scmp.lt.s32.totalorder %s522, 16
          %s524 = scalar_select %p523, %s522, 16
          %s525 = smul.u32 128, %s524
          %p526 = scmp.ne.s32.totalorder 0, %s525
          %s527 = smul.addr %s521, 8
          %s528 = scalar_lea.vmem %s3, %s527
          // Predicated region
          $region41: #{tpu_custom_call.1} parent=39 // pred_check
            %p529 = pneg %p526
          $region42: #{tpu_custom_call.1} parent=39 // pred_check_branch
            %531 = sbr.rel (%p529) target = $region44
          $region43: #{tpu_custom_call.1} parent=39 // pred_region
            // Predicated region
            $region45: #{tpu_custom_call.1} parent=43 // pred_check
              _
            $region46: #{tpu_custom_call.1} parent=43 // pred_check_branch
              %533 = sbr.rel (0) target = $region48
            $region47: #{tpu_custom_call.1} parent=43 // pred_region
              // Predicated region
              $region67: #{tpu_custom_call.1} parent=47 // pred_check
                _
              $region68: #{tpu_custom_call.1} parent=47 // pred_check_branch
                %612 = sbr.rel (0) target = $region70
              $region69: #{tpu_custom_call.1} parent=47 // pred_region
                %s613 = sshrl.u32 %s524, 4
                // While loop
                $region71: #{tpu_custom_call.1} parent=69 // loop_pre_header
                  _
                $region72: #{tpu_custom_call.1} parent=69 // loop_header
                  %s615 = sphi 0, %s617
                  %p616 = scmp.ge.s32.totalorder %s615, %s613
                  %s620 = sphi 0, %s657
                  %s621 = sphi %s517, %s660
                  %s622 = sphi %s528, %s661
                $region73: #{tpu_custom_call.1} parent=69 // loop_header_branch
                  %619 = sbr.rel (%p616) target = $region77
                $region74: #{tpu_custom_call.1} parent=69 // loop_body
                  %v623 = vld [vmem:[%s621] sm:$0xff]
                  %624 = vst [vmem:[%s622] sm:$0xff] %v623
                  %v625 = vld [vmem:[%s621 + $0x8] sm:$0xff]
                  %626 = vst [vmem:[%s622 + $0x8] sm:$0xff] %v625
                  %v627 = vld [vmem:[%s621 + $0x10] sm:$0xff]
                  %628 = vst [vmem:[%s622 + $0x10] sm:$0xff] %v627
                  %v629 = vld [vmem:[%s621 + $0x18] sm:$0xff]
                  %630 = vst [vmem:[%s622 + $0x18] sm:$0xff] %v629
                  %v631 = vld [vmem:[%s621 + $0x20] sm:$0xff]
                  %632 = vst [vmem:[%s622 + $0x20] sm:$0xff] %v631
                  %v633 = vld [vmem:[%s621 + $0x28] sm:$0xff]
                  %634 = vst [vmem:[%s622 + $0x28] sm:$0xff] %v633
                  %v635 = vld [vmem:[%s621 + $0x30] sm:$0xff]
                  %636 = vst [vmem:[%s622 + $0x30] sm:$0xff] %v635
                  %v637 = vld [vmem:[%s621 + $0x38] sm:$0xff]
                  %638 = vst [vmem:[%s622 + $0x38] sm:$0xff] %v637
                  %v639 = vld [vmem:[%s621 + $0x40] sm:$0xff]
                  %640 = vst [vmem:[%s622 + $0x40] sm:$0xff] %v639
                  %v641 = vld [vmem:[%s621 + $0x48] sm:$0xff]
                  %642 = vst [vmem:[%s622 + $0x48] sm:$0xff] %v641
                  %v643 = vld [vmem:[%s621 + $0x50] sm:$0xff]
                  %644 = vst [vmem:[%s622 + $0x50] sm:$0xff] %v643
                  %v645 = vld [vmem:[%s621 + $0x58] sm:$0xff]
                  %646 = vst [vmem:[%s622 + $0x58] sm:$0xff] %v645
                  %v647 = vld [vmem:[%s621 + $0x60] sm:$0xff]
                  %648 = vst [vmem:[%s622 + $0x60] sm:$0xff] %v647
                  %v649 = vld [vmem:[%s621 + $0x68] sm:$0xff]
                  %650 = vst [vmem:[%s622 + $0x68] sm:$0xff] %v649
                  %v651 = vld [vmem:[%s621 + $0x70] sm:$0xff]
                  %652 = vst [vmem:[%s622 + $0x70] sm:$0xff] %v651
                  %v653 = vld [vmem:[%s621 + $0x78] sm:$0xff]
                  %654 = vst [vmem:[%s622 + $0x78] sm:$0xff] %v653
                  %s655 = sadd.s32 1, %s620
                  %p656 = scmp.ge.s32.totalorder %s655, %s613
                  %s657 = scalar_select %p656, 0, %s655
                  %s658 = smul.u32 %s657, 128
                  %s659 = smul.u32 %s657, 128
                  %s660 = scalar_lea.vmem %s517, %s658 [#allocation4]
                  %s661 = scalar_lea.vmem %s528, %s659
                $region75: #{tpu_custom_call.1} parent=69 // loop_footer
                  %s617 = sadd.s32 %s615, 1
                $region76: #{tpu_custom_call.1} parent=69 // loop_footer_branch
                  %614 = sbr.rel target = $region72
                $region77: #{tpu_custom_call.1} parent=69 // loop_exit
                  _
                %s662 = sshrl.u32 %s524, 4
                %s663 = sand.u32 %s524, 15
                %s664 = smul.u32 %s662, 16
                %s665 = smul.u32 8, %s664
                %s666 = scalar_lea.vmem %s517, %s665 [#allocation4]
                %s667 = smul.u32 8, %s664
                %s668 = scalar_lea.vmem %s528, %s667
                // While loop
                $region78: #{tpu_custom_call.1} parent=69 // loop_pre_header
                  _
                $region79: #{tpu_custom_call.1} parent=69 // loop_header
                  %s670 = sphi 0, %s672
                  %p671 = scmp.ge.s32.totalorder %s670, %s663
                  %s675 = sphi 0, %s682
                  %s676 = sphi %s666, %s685
                  %s677 = sphi %s668, %s686
                $region80: #{tpu_custom_call.1} parent=69 // loop_header_branch
                  %674 = sbr.rel (%p671) target = $region84
                $region81: #{tpu_custom_call.1} parent=69 // loop_body
                  %v678 = vld [vmem:[%s676] sm:$0xff]
                  %679 = vst [vmem:[%s677] sm:$0xff] %v678
                  %s680 = sadd.s32 1, %s675
                  %p681 = scmp.ge.s32.totalorder %s680, %s663
                  %s682 = scalar_select %p681, 0, %s680
                  %s683 = smul.u32 %s682, 8
                  %s684 = smul.u32 %s682, 8
                  %s685 = scalar_lea.vmem %s666, %s683 [#allocation4]
                  %s686 = scalar_lea.vmem %s668, %s684
                $region82: #{tpu_custom_call.1} parent=69 // loop_footer
                  %s672 = sadd.s32 %s670, 1
                $region83: #{tpu_custom_call.1} parent=69 // loop_footer_branch
                  %669 = sbr.rel target = $region79
                $region84: #{tpu_custom_call.1} parent=69 // loop_exit
                  _
              $region70: #{tpu_custom_call.1} parent=47 // pred_fallthru
                _
              // Predicated region
              $region85: #{tpu_custom_call.1} parent=47 // pred_check
                _
              $region86: #{tpu_custom_call.1} parent=47 // pred_check_branch
                %688 = sbr.rel target = $region88
              $region87: #{tpu_custom_call.1} parent=47 // pred_region
                _
              $region88: #{tpu_custom_call.1} parent=47 // pred_fallthru
                _
            $region48: #{tpu_custom_call.1} parent=43 // pred_fallthru
              _
            // Predicated region
            $region49: #{tpu_custom_call.1} parent=43 // pred_check
              _
            $region50: #{tpu_custom_call.1} parent=43 // pred_check_branch
              %535 = sbr.rel target = $region52
            $region51: #{tpu_custom_call.1} parent=43 // pred_region
              %s537 = sshrl.u32 %s524, 4
              // While loop
              $region53: #{tpu_custom_call.1} parent=51 // loop_pre_header
                _
              $region54: #{tpu_custom_call.1} parent=51 // loop_header
                %s539 = sphi 0, %s541
                %p540 = scmp.ge.s32.totalorder %s539, %s537
                %s544 = sphi 0, %s581
                %s545 = sphi %s517, %s584
                %s546 = sphi %s528, %s585
              $region55: #{tpu_custom_call.1} parent=51 // loop_header_branch
                %543 = sbr.rel (%p540) target = $region59
              $region56: #{tpu_custom_call.1} parent=51 // loop_body
                %v547 = vld [vmem:[%s545] sm:$0xff]
                %548 = vst [vmem:[%s546] sm:$0xff] %v547
                %v549 = vld [vmem:[%s545 + $0x8] sm:$0xff]
                %550 = vst [vmem:[%s546 + $0x8] sm:$0xff] %v549
                %v551 = vld [vmem:[%s545 + $0x10] sm:$0xff]
                %552 = vst [vmem:[%s546 + $0x10] sm:$0xff] %v551
                %v553 = vld [vmem:[%s545 + $0x18] sm:$0xff]
                %554 = vst [vmem:[%s546 + $0x18] sm:$0xff] %v553
                %v555 = vld [vmem:[%s545 + $0x20] sm:$0xff]
                %556 = vst [vmem:[%s546 + $0x20] sm:$0xff] %v555
                %v557 = vld [vmem:[%s545 + $0x28] sm:$0xff]
                %558 = vst [vmem:[%s546 + $0x28] sm:$0xff] %v557
                %v559 = vld [vmem:[%s545 + $0x30] sm:$0xff]
                %560 = vst [vmem:[%s546 + $0x30] sm:$0xff] %v559
                %v561 = vld [vmem:[%s545 + $0x38] sm:$0xff]
                %562 = vst [vmem:[%s546 + $0x38] sm:$0xff] %v561
                %v563 = vld [vmem:[%s545 + $0x40] sm:$0xff]
                %564 = vst [vmem:[%s546 + $0x40] sm:$0xff] %v563
                %v565 = vld [vmem:[%s545 + $0x48] sm:$0xff]
                %566 = vst [vmem:[%s546 + $0x48] sm:$0xff] %v565
                %v567 = vld [vmem:[%s545 + $0x50] sm:$0xff]
                %568 = vst [vmem:[%s546 + $0x50] sm:$0xff] %v567
                %v569 = vld [vmem:[%s545 + $0x58] sm:$0xff]
                %570 = vst [vmem:[%s546 + $0x58] sm:$0xff] %v569
                %v571 = vld [vmem:[%s545 + $0x60] sm:$0xff]
                %572 = vst [vmem:[%s546 + $0x60] sm:$0xff] %v571
                %v573 = vld [vmem:[%s545 + $0x68] sm:$0xff]
                %574 = vst [vmem:[%s546 + $0x68] sm:$0xff] %v573
                %v575 = vld [vmem:[%s545 + $0x70] sm:$0xff]
                %576 = vst [vmem:[%s546 + $0x70] sm:$0xff] %v575
                %v577 = vld [vmem:[%s545 + $0x78] sm:$0xff]
                %578 = vst [vmem:[%s546 + $0x78] sm:$0xff] %v577
                %s579 = sadd.s32 1, %s544
                %p580 = scmp.ge.s32.totalorder %s579, %s537
                %s581 = scalar_select %p580, 0, %s579
                %s582 = smul.u32 %s581, 128
                %s583 = smul.u32 %s581, 128
                %s584 = scalar_lea.vmem %s517, %s582 [#allocation4]
                %s585 = scalar_lea.vmem %s528, %s583
              $region57: #{tpu_custom_call.1} parent=51 // loop_footer
                %s541 = sadd.s32 %s539, 1
              $region58: #{tpu_custom_call.1} parent=51 // loop_footer_branch
                %538 = sbr.rel target = $region54
              $region59: #{tpu_custom_call.1} parent=51 // loop_exit
                _
              %s586 = sshrl.u32 %s524, 4
              %s587 = sand.u32 %s524, 15
              %s588 = smul.u32 %s586, 16
              %s589 = smul.u32 8, %s588
              %s590 = scalar_lea.vmem %s517, %s589 [#allocation4]
              %s591 = smul.u32 8, %s588
              %s592 = scalar_lea.vmem %s528, %s591
              // While loop
              $region60: #{tpu_custom_call.1} parent=51 // loop_pre_header
                _
              $region61: #{tpu_custom_call.1} parent=51 // loop_header
                %s594 = sphi 0, %s596
                %p595 = scmp.ge.s32.totalorder %s594, %s587
                %s599 = sphi 0, %s606
                %s600 = sphi %s590, %s609
                %s601 = sphi %s592, %s610
              $region62: #{tpu_custom_call.1} parent=51 // loop_header_branch
                %598 = sbr.rel (%p595) target = $region66
              $region63: #{tpu_custom_call.1} parent=51 // loop_body
                %v602 = vld [vmem:[%s600] sm:$0xff]
                %603 = vst [vmem:[%s601] sm:$0xff] %v602
                %s604 = sadd.s32 1, %s599
                %p605 = scmp.ge.s32.totalorder %s604, %s587
                %s606 = scalar_select %p605, 0, %s604
                %s607 = smul.u32 %s606, 8
                %s608 = smul.u32 %s606, 8
                %s609 = scalar_lea.vmem %s590, %s607 [#allocation4]
                %s610 = scalar_lea.vmem %s592, %s608
              $region64: #{tpu_custom_call.1} parent=51 // loop_footer
                %s596 = sadd.s32 %s594, 1
              $region65: #{tpu_custom_call.1} parent=51 // loop_footer_branch
                %593 = sbr.rel target = $region61
              $region66: #{tpu_custom_call.1} parent=51 // loop_exit
                _
            $region52: #{tpu_custom_call.1} parent=43 // pred_fallthru
              _
          $region44: #{tpu_custom_call.1} parent=39 // pred_fallthru
            _
          %689 = vnop
        $region40: #{tpu_custom_call.1} parent=31 // pred_fallthru
          _
      $region32: #{tpu_custom_call.1} parent=5 // pred_fallthru
        _
      %p690 = scmp.le.s32.totalorder 2, %s10
      // Predicated region
      $region89: #{tpu_custom_call.1} parent=5 // pred_check
        %p691 = pneg %p690
      $region90: #{tpu_custom_call.1} parent=5 // pred_check_branch
        %693 = sbr.rel (%p691) target = $region92
      $region91: #{tpu_custom_call.1} parent=5 // pred_region
        %s694 = ssub.s32 %s10, 2
        // Predicated region
        $region93: #{tpu_custom_call.1} parent=91 // pred_check
          %p695 = pneg %p112
        $region94: #{tpu_custom_call.1} parent=91 // pred_check_branch
          %697 = sbr.rel (%p695) target = $region96
        $region95: #{tpu_custom_call.1} parent=91 // pred_region
          %s698 = sand.u32 %s97, 1
          %s699 = sand.u32 %s97, 1
          %s700 = smul.addr %s699, 128
          %s701 = scalar_lea.vmem [#allocation4], %s700
        $region96: #{tpu_custom_call.1} parent=91 // pred_fallthru
          _
      $region92: #{tpu_custom_call.1} parent=5 // pred_fallthru
        _
    $region6: #{tpu_custom_call.1} parent=1 // loop_footer
      %s14 = sadd.s32 1, %s10
    $region7: #{tpu_custom_call.1} parent=1 // loop_footer_branch
      %9 = sbr.rel target = $region3
    $region8: #{tpu_custom_call.1} parent=1 // loop_exit
      _
    %702 = vsyncpa [#allocation3], 1
    %s703 = scalar_lea.sflag [#allocation3], 1
    %704 = vsyncpa %s703, 1

</llo_original>
